<compile_context>
chip_gen: v5e
topology: v5e:2x2
jax: 0.10.0
libtpu: 0.0.40
codegen_flags: <defaults>
</compile_context>

<pallas_src>
import functools

import jax
import jax.numpy as jnp
from jax.experimental import pallas as pl
from jax.experimental.pallas import tpu as pltpu


def _round_up(x: int, m: int) -> int:
    return ((x + m - 1) // m) * m


def _linear_kernel(x_ref, w_ref, b_ref, o_ref, acc_ref):
    # x_ref: (tm, tk)   activation tile
    # w_ref: (tn, tk)   weight tile kept in PyTorch (out, in) layout; the
    #                   transpose is folded into the contraction -> no HBM
    #                   transpose pass of W per call.
    # b_ref: (1, tn)    bias tile (index_map constant over K -> stays resident)
    # o_ref: (tm, tn)   output tile (lane-dense, tn multiple of 128)
    # acc_ref: (tm, tn) f32 accumulator scratch, persists across the K axis
    k = pl.program_id(2)

    @pl.when(k == 0)
    def _():
        acc_ref[...] = jnp.zeros_like(acc_ref)

    acc_ref[...] += jax.lax.dot_general(
        x_ref[...],
        w_ref[...],
        dimension_numbers=(((1,), (1,)), ((), ())),  # contract last dim of both
        preferred_element_type=jnp.float32,
    )

    @pl.when(k == pl.num_programs(2) - 1)
    def _():
        # Bias added once at finalize (not every K step).
        o_ref[...] = (acc_ref[...] + b_ref[...].astype(jnp.float32)).astype(o_ref.dtype)


@functools.partial(jax.jit, static_argnames=("tm", "tn", "tk"))
def _linear_forward(x, weight, bias, *, tm, tn, tk):
    B, S, H_in = x.shape
    H_out, H_in_w = weight.shape
    assert H_in_w == H_in, "weight must be (H_out, H_in) (PyTorch nn.Linear layout)"
    M = B * S
    x2d = x.reshape(M, H_in)

    # Clip tiles to the (alignment-padded) problem size so small shapes don't
    # over-pad, while keeping the TPU (8, 128) block alignment and lane-dense
    # (>=128) output tiles.
    tm = min(tm, _round_up(M, 8))
    tn = min(tn, _round_up(H_out, 128))
    tk = min(tk, _round_up(H_in, 128))

    Mp = _round_up(M, tm)
    Np = _round_up(H_out, tn)
    Kp = _round_up(H_in, tk)

    if (Mp, Kp) != (M, H_in):
        x2d = jnp.pad(x2d, ((0, Mp - M), (0, Kp - H_in)))
    w = weight
    if (Np, Kp) != (H_out, H_in):
        w = jnp.pad(w, ((0, Np - H_out), (0, Kp - H_in)))
    b = bias
    if Np != H_out:
        b = jnp.pad(b, (0, Np - H_out))
    b2d = b.reshape(1, Np)

    grid = (Mp // tm, Np // tn, Kp // tk)

    itemsize = jnp.dtype(x.dtype).itemsize
    cost = pl.CostEstimate(
        flops=2 * Mp * Np * Kp,
        transcendentals=0,
        bytes_accessed=(Mp * Kp + Np * Kp + Np + Mp * Np) * itemsize,
    )

    out2d = pl.pallas_call(
        _linear_kernel,
        out_shape=jax.ShapeDtypeStruct((Mp, Np), x.dtype),
        grid_spec=pltpu.PrefetchScalarGridSpec(
            num_scalar_prefetch=0,
            grid=grid,
            in_specs=[
                pl.BlockSpec((tm, tk), lambda i, j, k: (i, k)),   # x
                pl.BlockSpec((tn, tk), lambda i, j, k: (j, k)),   # W (out, in)
                pl.BlockSpec((1, tn), lambda i, j, k: (0, j)),    # bias
            ],
            out_specs=pl.BlockSpec((tm, tn), lambda i, j, k: (i, j)),
            scratch_shapes=[pltpu.VMEM((tm, tn), jnp.float32)],
        ),
        compiler_params=pltpu.CompilerParams(
            # M/N axes parallel (sharded across TCs on v7x), K reduction arbitrary.
            dimension_semantics=("parallel", "parallel", "arbitrary"),
        ),
        cost_estimate=cost,
    )(x2d, w, b2d)

    if (Mp, Np) != (M, H_out):
        out2d = out2d[:M, :H_out]
    return out2d.reshape(B, S, H_out)


def abs_lrp_module_forward(x, weight, bias, *, zero_params=None,
                           tm=256, tn=256, tk=256):
    """Forward of AbsLRPModule wrapping nn.Linear.

    x:      (B, S, H_in)
    weight: (H_out, H_in)   -- PyTorch nn.Linear convention
    bias:   (H_out,)
    returns (B, S, H_out)
    """
    del zero_params  # backward-only LRP knob (relevance rule), no forward effect
    return _linear_forward(x, weight, bias, tm=tm, tn=tn, tk=tk)


if __name__ == "__main__":
    key = jax.random.PRNGKey(0)
    kx, kw, kb = jax.random.split(key, 3)

    B, S, H = 2, 8, 32  # small demo shapes: batch=2, seq=8, hidden=32

    x = jax.random.normal(kx, (B, S, H), dtype=jnp.float32)
    weight = jax.random.normal(kw, (H, H), dtype=jnp.float32) * 0.05
    bias = jax.random.normal(kb, (H,), dtype=jnp.float32) * 0.05

    out = abs_lrp_module_forward(x, weight, bias)
    out = jax.block_until_ready(out)

    # Reference: what the wrapped nn.Linear forward computes.
    ref = x @ weight.T + bias
    assert out.shape == (B, S, H)
    assert jnp.allclose(out, ref, atol=1e-5, rtol=1e-5), "mismatch vs reference"

    print("KERNEL_OK")
</pallas_src>

<mosaic_0001>
module attributes {stable_mosaic.version = 11 : i64} {
  func.func @_linear_kernel(%arg0: i32, %arg1: i32, %arg2: i32, %arg3: memref<16x128xf32, #tpu.memory_space<vmem>>, %arg4: memref<128x128xf32, #tpu.memory_space<vmem>>, %arg5: memref<1x128xf32, #tpu.memory_space<vmem>>, %arg6: memref<16x128xf32, #tpu.memory_space<vmem>>, %arg7: memref<16x128xf32, #tpu.memory_space<vmem>>) attributes {dimension_semantics = [#tpu.dimension_semantics<parallel>, #tpu.dimension_semantics<parallel>, #tpu.dimension_semantics<arbitrary>], iteration_bounds = array<i64: 1, 1, 1>, scalar_prefetch = 0 : i64, scratch_operands = 1 : i64, tpu.core_type = #tpu.core_type<tc>, window_params = [{transform_indices = @transform_0, window_bounds = array<i64: 16, 128>}, {transform_indices = @transform_1, window_bounds = array<i64: 128, 128>}, {transform_indices = @transform_2, window_bounds = array<i64: 1, 128>}, {transform_indices = @transform_3, window_bounds = array<i64: 16, 128>}]} {
    %c0_i32 = arith.constant 0 : i32
    %0 = arith.cmpi eq, %arg2, %c0_i32 : i32
    %1 = arith.extui %0 : i1 to i32
    %c0_i32_0 = arith.constant 0 : i32
    %2 = arith.cmpi ne, %1, %c0_i32_0 : i32
    scf.if %2 {
      %cst_10 = arith.constant 0.000000e+00 : f32
      %12 = vector.broadcast %cst_10 : f32 to vector<16x128xf32>
      %c0_11 = arith.constant 0 : index
      %c0_12 = arith.constant 0 : index
      %13 = vector.load %arg7[%c0_11, %c0_12] : memref<16x128xf32, #tpu.memory_space<vmem>>, vector<16x128xf32>
      tpu.vector_store %arg7[%c0_11, %c0_12], %12 {strides = array<i32>} : memref<16x128xf32, #tpu.memory_space<vmem>>, vector<16x128xf32>,
    } else {
    }
    %c0 = arith.constant 0 : index
    %c0_1 = arith.constant 0 : index
    %3 = vector.load %arg7[%c0, %c0_1] : memref<16x128xf32, #tpu.memory_space<vmem>>, vector<16x128xf32>
    %c0_2 = arith.constant 0 : index
    %c0_3 = arith.constant 0 : index
    %4 = vector.load %arg3[%c0_2, %c0_3] : memref<16x128xf32, #tpu.memory_space<vmem>>, vector<16x128xf32>
    %c0_4 = arith.constant 0 : index
    %c0_5 = arith.constant 0 : index
    %5 = vector.load %arg4[%c0_4, %c0_5] : memref<128x128xf32, #tpu.memory_space<vmem>>, vector<128x128xf32>
    %cst = arith.constant dense<0.000000e+00> : vector<16x128xf32>
    %6 = tpu.matmul %4, %5, %cst {dimension_numbers = #tpu.dot_dimension_numbers<[1], [1], [0], [0], [0, 0, 1, 0], [], []>} : vector<16x128xf32>, vector<128x128xf32>, vector<16x128xf32> -> vector<16x128xf32>
    %7 = arith.addf %3, %6 : vector<16x128xf32>
    %c0_6 = arith.constant 0 : index
    %c0_7 = arith.constant 0 : index
    %8 = vector.load %arg7[%c0_6, %c0_7] : memref<16x128xf32, #tpu.memory_space<vmem>>, vector<16x128xf32>
    tpu.vector_store %arg7[%c0_6, %c0_7], %7 {strides = array<i32>} : memref<16x128xf32, #tpu.memory_space<vmem>>, vector<16x128xf32>,
    %c0_i32_8 = arith.constant 0 : i32
    %9 = arith.cmpi eq, %arg2, %c0_i32_8 : i32
    %10 = arith.extui %9 : i1 to i32
    %c0_i32_9 = arith.constant 0 : i32
    %11 = arith.cmpi ne, %10, %c0_i32_9 : i32
    scf.if %11 {
      %c0_10 = arith.constant 0 : index
      %c0_11 = arith.constant 0 : index
      %12 = vector.load %arg7[%c0_10, %c0_11] : memref<16x128xf32, #tpu.memory_space<vmem>>, vector<16x128xf32>
      %c0_12 = arith.constant 0 : index
      %c0_13 = arith.constant 0 : index
      %13 = vector.load %arg5[%c0_12, %c0_13] : memref<1x128xf32, #tpu.memory_space<vmem>>, vector<1x128xf32>
      %14 = vector.broadcast %13 : vector<1x128xf32> to vector<16x128xf32>
      %15 = arith.addf %12, %14 : vector<16x128xf32>
      %c0_14 = arith.constant 0 : index
      %c0_15 = arith.constant 0 : index
      %16 = vector.load %arg6[%c0_14, %c0_15] : memref<16x128xf32, #tpu.memory_space<vmem>>, vector<16x128xf32>
      tpu.vector_store %arg6[%c0_14, %c0_15], %15 {strides = array<i32>} : memref<16x128xf32, #tpu.memory_space<vmem>>, vector<16x128xf32>,
    } else {
    }
    return
  }
  func.func @transform_0(%arg0: i32, %arg1: i32, %arg2: i32) -> (i32, i32) {
    %c0_i32 = arith.constant 0 : i32
    return %arg0, %arg2 : i32, i32
  }
  func.func @transform_1(%arg0: i32, %arg1: i32, %arg2: i32) -> (i32, i32) {
    %c0_i32 = arith.constant 0 : i32
    return %arg1, %arg2 : i32, i32
  }
  func.func @transform_2(%arg0: i32, %arg1: i32, %arg2: i32) -> (i32, i32) {
    %c0_i32 = arith.constant 0 : i32
    %c0_i32_0 = arith.constant 0 : i32
    return %c0_i32, %arg1 : i32, i32
  }
  func.func @transform_3(%arg0: i32, %arg1: i32, %arg2: i32) -> (i32, i32) {
    %c0_i32 = arith.constant 0 : i32
    return %arg0, %arg1 : i32, i32
  }
}

</mosaic_0001>

<llo_original>
// kernel: _linear_forward.1
$region0: #{_linear_forward.1}
  #allocation0 [shape = 'u32[]', space=smem, size = 0x4, offset = 0x4, fixed_abs, tag = 'smem constant byte address 0x4 - core index']
  #allocation1 [shape = 'u32[72,128]{1,0:T(1,128)}', space=vmem, size = 0x9000, scoped, tag = 'internal scratch']
  #allocation2 [shape = 'f32[16,128]{1,0:T(8,128)}', space=vmem, size = 0x2000, scoped, tag = 'scratch operand']
  %s0 = inlined_call_operand.vmem [shape: f32[16,128], index: 0, kind: input, shape index: {}]
  %s1 = inlined_call_operand.vmem [shape: f32[128,128], index: 1, kind: input, shape index: {}]
  %s2 = inlined_call_operand.vmem [shape: f32[1,128], index: 2, kind: input, shape index: {}]
  %s3 = inlined_call_operand.vmem [shape: f32[16,128], index: 3, kind: output, shape index: {}]
  %s4 = sld [smem:[#allocation0]]
  $region30: #{_linear_forward.1} parent=0
    _
  %s6 = ssub.s32 1, %s4
  %s7 = scalar_select 0, %s6, %s4
  // Predicated region
  $region2: #{_linear_forward.1} parent=0 // pred_check
    _
  $region3: #{_linear_forward.1} parent=0 // pred_check_branch
    %9 = sbr.rel (0) target = $region5
  $region4: #{_linear_forward.1} parent=0 // pred_region
    _
  $region5: #{_linear_forward.1} parent=0 // pred_fallthru
    _
  // Predicated region
  $region6: #{_linear_forward.1} parent=0 // pred_check
    _
  $region7: #{_linear_forward.1} parent=0 // pred_check_branch
    %11 = sbr.rel (0) target = $region9
  $region8: #{_linear_forward.1} parent=0 // pred_region
    _
  $region9: #{_linear_forward.1} parent=0 // pred_fallthru
    _
  // Predicated region
  $region10: #{_linear_forward.1} parent=0 // pred_check
    _
  $region11: #{_linear_forward.1} parent=0 // pred_check_branch
    %13 = sbr.rel (0) target = $region13
  $region12: #{_linear_forward.1} parent=0 // pred_region
    _
  $region13: #{_linear_forward.1} parent=0 // pred_fallthru
    _
  %p14 = scmp.eq.s32.totalorder 0, 0
  // Predicated region
  $region14: #{_linear_forward.1} parent=0 // pred_check
    %p15 = pneg %p14
  $region15: #{_linear_forward.1} parent=0 // pred_check_branch
    %17 = sbr.rel (%p15) target = $region17
  $region16: #{_linear_forward.1} parent=0 // pred_region
    %18 = vst [vmem:[#allocation2] sm:$0xff] 0.0
    %19 = vst [vmem:[#allocation2 + $0x8] sm:$0xff] 0.0
  $region17: #{_linear_forward.1} parent=0 // pred_fallthru
    _
  %v20 = vld [vmem:[#allocation2] sm:$0xff]
  %v21 = vld [vmem:[#allocation2 + $0x8] sm:$0xff]
  %v22 = vld [vmem:[%s0] sm:$0xff]
  %v23 = vld [vmem:[%s0 + $0x8] sm:$0xff]
  %v24 = vld [vmem:[%s1] sm:$0xff]
  %v25 = vld [vmem:[%s1 + $0x8] sm:$0xff]
  %v26 = vld [vmem:[%s1 + $0x10] sm:$0xff]
  %v27 = vld [vmem:[%s1 + $0x18] sm:$0xff]
  %v28 = vld [vmem:[%s1 + $0x20] sm:$0xff]
  %v29 = vld [vmem:[%s1 + $0x28] sm:$0xff]
  %v30 = vld [vmem:[%s1 + $0x30] sm:$0xff]
  %v31 = vld [vmem:[%s1 + $0x38] sm:$0xff]
  %v32 = vld [vmem:[%s1 + $0x40] sm:$0xff]
  %v33 = vld [vmem:[%s1 + $0x48] sm:$0xff]
  %v34 = vld [vmem:[%s1 + $0x50] sm:$0xff]
  %v35 = vld [vmem:[%s1 + $0x58] sm:$0xff]
  %v36 = vld [vmem:[%s1 + $0x60] sm:$0xff]
  %v37 = vld [vmem:[%s1 + $0x68] sm:$0xff]
  %v38 = vld [vmem:[%s1 + $0x70] sm:$0xff]
  %v39 = vld [vmem:[%s1 + $0x78] sm:$0xff]
  %40 = vmatpush.xpose.msra.mxu0 %v39
  %41 = vmatpush.xpose.msra.mxu0 %v38
  %42 = vmatpush.xpose.msra.mxu0 %v37
  %43 = vmatpush.xpose.msra.mxu0 %v36
  %44 = vmatpush.xpose.msra.mxu0 %v35
  %45 = vmatpush.xpose.msra.mxu0 %v34
  %46 = vmatpush.xpose.msra.mxu0 %v33
  %47 = vmatpush.xpose.msra.mxu0 %v32
  %48 = vmatpush.xpose.msra.mxu0 %v31
  %49 = vmatpush.xpose.msra.mxu0 %v30
  %50 = vmatpush.xpose.msra.mxu0 %v29
  %51 = vmatpush.xpose.msra.mxu0 %v28
  %52 = vmatpush.xpose.msra.mxu0 %v27
  %53 = vmatpush.xpose.msra.mxu0 %v26
  %54 = vmatpush.xpose.msra.mxu0 %v25
  %55 = vmatpush.xpose.msra.mxu0 %v24
  %56 = vmatmul.f32.gmra.mxu0 %v22
  %v57 = vpop.f32.mrf.mxu0
  %v58 = vadd.f32 0.0, %v57
  %59 = vmatmul.f32.gmra.mxu0 %v23
  %v60 = vpop.f32.mrf.mxu0
  %v61 = vadd.f32 0.0, %v60
  %62 = vdwg.mxu0
  %v63 = vadd.f32 %v20, %v58
  %v64 = vadd.f32 %v21, %v61
  %65 = vst [vmem:[#allocation2] sm:$0xff] %v63
  %66 = vst [vmem:[#allocation2 + $0x8] sm:$0xff] %v64
  // Predicated region
  $region18: #{_linear_forward.1} parent=0 // pred_check
    %p67 = pneg %p14
  $region19: #{_linear_forward.1} parent=0 // pred_check_branch
    %69 = sbr.rel (%p67) target = $region21
  $region20: #{_linear_forward.1} parent=0 // pred_region
    %v70 = vld [vmem:[#allocation2] sm:$0xff]
    %v71 = vld [vmem:[#allocation2 + $0x8] sm:$0xff]
    %v72 = vld [vmem:[%s2] sm:$0x1]
    %v74 = vperm.slane %v72, 0
    %v76 = vadd.f32 %v70, %v74
    %v77 = vadd.f32 %v71, %v74
    %78 = vst [vmem:[%s3] sm:$0xff] %v76
    %79 = vst [vmem:[%s3 + $0x8] sm:$0xff] %v77
  $region21: #{_linear_forward.1} parent=0 // pred_fallthru
    _
  // Predicated region
  $region22: #{_linear_forward.1} parent=0 // pred_check
    _
  $region23: #{_linear_forward.1} parent=0 // pred_check_branch
    %81 = sbr.rel (0) target = $region25
  $region24: #{_linear_forward.1} parent=0 // pred_region
    _
  $region25: #{_linear_forward.1} parent=0 // pred_fallthru
    _
  // Predicated region
  $region26: #{_linear_forward.1} parent=0 // pred_check
    _
  $region27: #{_linear_forward.1} parent=0 // pred_check_branch
    %83 = sbr.rel (0) target = $region29
  $region28: #{_linear_forward.1} parent=0 // pred_region
    _
  $region29: #{_linear_forward.1} parent=0 // pred_fallthru
    _

</llo_original>
